<compile_context>
chip_gen: v6e
topology: v6e:2x2x1
jax: 0.10.0
libtpu: 0.0.40
codegen_flags: <defaults>
</compile_context>

<pallas_src>
import functools
import math

import jax
import jax.numpy as jnp
import numpy as np
from jax.experimental import pallas as pl
from jax.experimental.pallas import tpu as pltpu


def _contrast_loss_single_block_kernel(x_ref, o_ref, *, c, const_term, inv_bsz):
    """Whole (bsz, m+1) array resident in VMEM; one invocation, no grid."""
    x = x_ref[...]                                    # (bsz, m+1) f32
    pos = jnp.sum(jnp.log(x[:, :1]), keepdims=True)   # sum_b log x[b,0]   (1,1)
    den = jnp.sum(jnp.log(x + c), keepdims=True)      # sum_{b,j} log(x+c) (1,1)
    o_ref[...] = -(pos - den + const_term) * inv_bsz


def _contrast_loss_tiled_kernel(x_ref, o_ref, acc_ref, *, c, const_term,
                                inv_bsz, bsz, tile_rows):
    """Batch-tiled reduction: grid=(num_row_tiles,), accumulator in VMEM scratch."""
    i = pl.program_id(0)

    @pl.when(i == 0)
    def _init():
        acc_ref[...] = jnp.zeros_like(acc_ref)

    x = x_ref[...]                                    # (tile_rows, m+1) f32
    log_all = jnp.log(x + c)                          # single EUP pass over data
    log_pos = jnp.log(x[:, :1])                       # (tile_rows, 1), tiny

    if bsz % tile_rows != 0:
        # Only traced when the batch was padded: rows >= bsz contribute exactly 0.
        rem = bsz - i * tile_rows
        row_ok = jax.lax.broadcasted_iota(jnp.int32, (tile_rows, 1), 0) < rem
        log_all = jnp.where(row_ok, log_all, 0.0)
        log_pos = jnp.where(row_ok, log_pos, 0.0)

    part = jnp.sum(log_pos, keepdims=True) - jnp.sum(log_all, keepdims=True)
    acc_ref[...] += part

    @pl.when(i == pl.num_programs(0) - 1)
    def _finalize():
        o_ref[...] = -(acc_ref[...] + const_term) * inv_bsz


def _round_up(n, k):
    return ((n + k - 1) // k) * k


def contrast_loss(x, num_data, *, tile_rows=None, force_tiled=False,
                  single_block_max_bytes=8 * 1024 * 1024):
    """CRD ContrastLoss.  x: (bsz, m+1, 1) float.  Returns loss of shape (1,)."""
    bsz = int(x.shape[0])
    m = int(x.shape[1]) - 1
    cols = m + 1
    pn = 1.0 / float(num_data)
    eps = 1e-7
    c = m * pn + eps
    # sum(log_D1)+sum(log_D0) = sum_b log x[b,0] + bsz*m*log(m*Pn) - sum log(x+c)
    const_term = bsz * m * math.log(m * pn)
    inv_bsz = 1.0 / bsz

    x2d = jnp.reshape(x, (bsz, cols)).astype(jnp.float32)   # squeeze trailing 1

    if not force_tiled and bsz * cols * 4 <= single_block_max_bytes:
        # Small case: pure fixed-overhead regime -> no grid machinery at all.
        kernel = functools.partial(_contrast_loss_single_block_kernel,
                                   c=c, const_term=const_term, inv_bsz=inv_bsz)
        out = pl.pallas_call(
            kernel,
            out_shape=jax.ShapeDtypeStruct((1, 1), jnp.float32),
        )(x2d)
        return jnp.reshape(out, (1,))

    # ---- batch-tiled accumulator path (realistic CRD sizes) ----------------
    if tile_rows is None:
        # ~4 MiB per input block: double-buffered footprint (~8 MiB) is safe on
        # v5e's 16 MiB scoped default and well under v7x's 64 MiB physical
        # VMEM, while big enough to amortize per-step grid overhead on v6e.
        tile_rows = max(8, ((4 * 1024 * 1024) // (cols * 4)) // 8 * 8)
    tile_rows = max(8, (tile_rows // 8) * 8)          # sublane multiple of 8
    tile_rows = min(tile_rows, _round_up(bsz, 8))

    num_tiles = pl.cdiv(bsz, tile_rows)
    padded_rows = num_tiles * tile_rows
    if padded_rows != bsz:
        # Pad with benign 1.0 rows; the kernel masks rows >= bsz, so exact.
        x2d = jnp.pad(x2d, ((0, padded_rows - bsz), (0, 0)), constant_values=1.0)

    kernel = functools.partial(_contrast_loss_tiled_kernel,
                               c=c, const_term=const_term, inv_bsz=inv_bsz,
                               bsz=bsz, tile_rows=tile_rows)
    out = pl.pallas_call(
        kernel,
        out_shape=jax.ShapeDtypeStruct((1, 1), jnp.float32),
        grid=(num_tiles,),
        in_specs=[pl.BlockSpec((tile_rows, cols), lambda i: (i, 0))],
        out_specs=pl.BlockSpec((1, 1), lambda i: (0, 0)),
        scratch_shapes=[pltpu.VMEM((1, 1), jnp.float32)],
        compiler_params=pltpu.CompilerParams(
            dimension_semantics=("arbitrary",),     # reduction into one accumulator
            vmem_limit_bytes=32 * 1024 * 1024,
        ),
    )(x2d)
    return jnp.reshape(out, (1,))


def _contrast_loss_ref(x, num_data):
    """float64 NumPy reference mirroring the PyTorch ContrastLoss.forward."""
    x = np.asarray(x, dtype=np.float64)
    bsz = x.shape[0]
    m = x.shape[1] - 1
    pn = 1.0 / float(num_data)
    eps = 1e-7
    x2 = x.reshape(bsz, m + 1)
    p_pos = x2[:, 0]
    log_d1 = np.log(p_pos / (p_pos + m * pn + eps))
    p_neg = x2[:, 1:]
    log_d0 = np.log((m * pn) / (p_neg + m * pn + eps))
    loss = -(log_d1.sum() + log_d0.sum()) / bsz
    return np.array([loss], dtype=np.float64)


if __name__ == "__main__":
    num_data = 50000
    key_a, key_b = jax.random.split(jax.random.PRNGKey(0))

    # --- small CRD scores: single-block, no-grid path ------------------------
    bsz_a, n_neg_a = 4, 16
    x_a = jax.random.uniform(key_a, (bsz_a, n_neg_a + 1, 1), jnp.float32,
                             minval=1e-4, maxval=1.0)
    loss_a = jax.block_until_ready(contrast_loss(x_a, num_data))
    ref_a = _contrast_loss_ref(np.asarray(x_a), num_data)
    assert loss_a.shape == (1,)
    assert np.allclose(np.asarray(loss_a), ref_a, rtol=1e-5, atol=1e-4), (loss_a, ref_a)

    # --- larger batch: tiled accumulator path (exercises remainder masking) --
    bsz_b, n_neg_b = 200, 100
    x_b = jax.random.uniform(key_b, (bsz_b, n_neg_b + 1, 1), jnp.float32,
                             minval=1e-4, maxval=1.0)
    loss_b = jax.block_until_ready(
        contrast_loss(x_b, num_data, tile_rows=64, force_tiled=True))
    ref_b = _contrast_loss_ref(np.asarray(x_b), num_data)
    assert loss_b.shape == (1,)
    assert np.allclose(np.asarray(loss_b), ref_b, rtol=2e-4, atol=1e-2), (loss_b, ref_b)

    print("KERNEL_OK")
</pallas_src>

<mosaic_0001>
module attributes {stable_mosaic.version = 11 : i64} {
  func.func @_contrast_loss_single_block_kernel(%arg0: memref<4x17xf32, #tpu.memory_space<vmem>>, %arg1: memref<1x1xf32, #tpu.memory_space<vmem>>) attributes {dimension_semantics = [], scalar_prefetch = 0 : i64, scratch_operands = 0 : i64, tpu.core_type = #tpu.core_type<tc>} {
    %c0 = arith.constant 0 : index
    %c0_0 = arith.constant 0 : index
    %0 = vector.load %arg0[%c0, %c0_0] : memref<4x17xf32, #tpu.memory_space<vmem>>, vector<4x17xf32>
    %1 = vector.extract_strided_slice %0 {offsets = [0, 0], sizes = [4, 1], strides = [1, 1]} : vector<4x17xf32> to vector<4x1xf32>
    %2 = math.log %1 : vector<4x1xf32>
    %3 = vector.shape_cast %2 : vector<4x1xf32> to vector<1x4x1xf32>
    %cst = arith.constant dense<0.000000e+00> : vector<1xf32>
    %4 = vector.multi_reduction <add>, %3, %cst [1, 2] : vector<1x4x1xf32> to vector<1xf32>
    %5 = vector.shape_cast %4 : vector<1xf32> to vector<1x1x1xf32>
    %6 = vector.extract %5[0, 0, 0] : f32 from vector<1x1x1xf32>
    %7 = vector.broadcast %6 : f32 to vector<1x1xf32>
    %cst_1 = arith.constant 3.201000e-04 : f32
    %8 = vector.broadcast %cst_1 : f32 to vector<4x17xf32>
    %9 = arith.addf %0, %8 : vector<4x17xf32>
    %10 = math.log %9 : vector<4x17xf32>
    %11 = vector.shape_cast %10 : vector<4x17xf32> to vector<1x4x17xf32>
    %cst_2 = arith.constant dense<0.000000e+00> : vector<1xf32>
    %12 = vector.multi_reduction <add>, %11, %cst_2 [1, 2] : vector<1x4x17xf32> to vector<1xf32>
    %13 = vector.shape_cast %12 : vector<1xf32> to vector<1x1x1xf32>
    %14 = vector.extract %13[0, 0, 0] : f32 from vector<1x1x1xf32>
    %15 = vector.broadcast %14 : f32 to vector<1x1xf32>
    %16 = arith.subf %7, %15 : vector<1x1xf32>
    %cst_3 = arith.constant -515.020142 : f32
    %17 = vector.broadcast %cst_3 : f32 to vector<1x1xf32>
    %18 = arith.addf %16, %17 : vector<1x1xf32>
    %cst_4 = arith.constant 0.000000e+00 : f32
    %19 = vector.broadcast %cst_4 : f32 to vector<1x1xf32>
    %20 = arith.subf %19, %18 : vector<1x1xf32>
    %cst_5 = arith.constant 2.500000e-01 : f32
    %21 = vector.broadcast %cst_5 : f32 to vector<1x1xf32>
    %22 = arith.mulf %20, %21 : vector<1x1xf32>
    %c0_6 = arith.constant 0 : index
    %c0_7 = arith.constant 0 : index
    %23 = vector.load %arg1[%c0_6, %c0_7] : memref<1x1xf32, #tpu.memory_space<vmem>>, vector<1x1xf32>
    tpu.vector_store %arg1[%c0_6, %c0_7], %22 {strides = array<i32>} : memref<1x1xf32, #tpu.memory_space<vmem>>, vector<1x1xf32>,
    return
  }
}

</mosaic_0001>

<llo_original>
// kernel: tpu_custom_call.1
$region0: #{tpu_custom_call.1}
  #allocation0 [shape = 'u32[]', space=smem, size = 0x4, offset = 0x4, fixed_abs, tag = 'smem constant byte address 0x4 - core index']
  #allocation1 [shape = 'u32[144,128]{1,0:T(1,128)}', space=vmem, size = 0x12000, scoped, tag = 'internal scratch']
  %s0 = inlined_call_operand.hbm [shape: f32[4,17], index: 0, kind: input, shape index: {}]
  %s1 = inlined_call_operand.hbm [shape: f32[1,1], index: 1, kind: output, shape index: {}]
  %s2 = sld [smem:[#allocation0]]
  $region18: #{tpu_custom_call.1} parent=0
    _
  %s4 = ssub.s32 1, %s2
  %s5 = scalar_select 0, %s4, %s2
  $region1: #{tpu_custom_call.1} parent=0
    #allocation2 [shape = 'u8[2048]{0}', space=vmem, size = 0x800, scoped, tag = 'input window, operand 0, single buffered']
    #allocation3 [shape = 's32[1]{0}', space=sflag, size = 0x4, scoped, tag = 'scoped memory for tpu_custom_call.1']
    #allocation4 [shape = 's32[1]{0}', space=sflag, size = 0x4, scoped, tag = 'scoped memory for tpu_custom_call.1']
    #allocation5 [shape = 'u8[512]{0}', space=vmem, size = 0x400, scoped, tag = 'output window, operand 0, single buffered']
    %6 = vsyncpa [#allocation3], 0
    %7 = vsyncpa [#allocation4], 0
    // Predicated region
    $region2: #{tpu_custom_call.1} parent=1 // pred_check
      _
    $region3: #{tpu_custom_call.1} parent=1 // pred_check_branch
      %9 = sbr.rel (0) target = $region5
    $region4: #{tpu_custom_call.1} parent=1 // pred_region
      %s11 = ssub.s32 64, 64
      %12 = vsyncadd [#allocation3], %s11
      %s14 = sshll.u32 [#allocation2], 4
      %s15 = int_to_ptr.vmem [resolvable:$true] %s14
      %17 = dma.hbm_to_vmem [thread:$0]  %s0, 64, %s15, [#allocation3]
    $region5: #{tpu_custom_call.1} parent=1 // pred_fallthru
      _
    // Predicated region
    $region6: #{tpu_custom_call.1} parent=1 // pred_check
      _
    $region7: #{tpu_custom_call.1} parent=1 // pred_check_branch
      %19 = sbr.rel (0) target = $region9
    $region8: #{tpu_custom_call.1} parent=1 // pred_region
      %20 = dma.done [#allocation3], 64
    $region9: #{tpu_custom_call.1} parent=1 // pred_fallthru
      _
    %v21 = vld [vmem:[#allocation2] sm:$0xf]
    %v22 = vlog2.pop %v21
    %v23 = vmul.f32 %v22, 0.6931472
    %vm24 = vcmask 3072
    %v25 = vsel %vm24, %v23, 0.0
    %26 = vadd.xlane.f32.xlu0 %v25
    %v27 = vpop.xlane.xlu0 %26
    %v28 = vrot.slane %v27, 4
    %v29 = vadd.f32 %v27, %v28
    %v30 = vrot.slane %v29, 2
    %v31 = vadd.f32 %v29, %v30
    %v32 = vrot.slane %v31, 1
    %v33 = vadd.f32 %v31, %v32
    %s34 = vtos %v33
    %v35 = vstv %s34
    %v36 = vadd.f32 %v21, 0.0003201
    %v37 = vlog2.pop %v36
    %v38 = vmul.f32 %v37, 0.6931472
    %vm39 = vcmask 134144
    %v40 = vsel %vm39, %v38, 0.0
    %41 = vadd.xlane.f32.xlu0 %v40
    %v42 = vpop.xlane.xlu0 %41
    %v43 = vrot.slane %v42, 4
    %v44 = vadd.f32 %v42, %v43
    %v45 = vrot.slane %v44, 2
    %v46 = vadd.f32 %v44, %v45
    %v47 = vrot.slane %v46, 1
    %v48 = vadd.f32 %v46, %v47
    %s49 = vtos %v48
    %v50 = vstv %s49
    %v51 = vsub.f32 %v35, %v50
    %v52 = vadd.f32 %v51, -515.02014
    %v53 = vsub.f32 0.0, %v52
    %v54 = vmul.f32 %v53, 0.25
    %vm55 = vcmask 0
    %56 = vst.msk [vmem:[#allocation5] sm:$0x1] %vm55, %v54
    // Predicated region
    $region10: #{tpu_custom_call.1} parent=1 // pred_check
      _
    $region11: #{tpu_custom_call.1} parent=1 // pred_check_branch
      %58 = sbr.rel (0) target = $region13
    $region12: #{tpu_custom_call.1} parent=1 // pred_region
      %s60 = ssub.s32 16, 16
      %61 = vsyncadd [#allocation4], %s60
      %s63 = sshll.u32 [#allocation5], 4
      %s64 = int_to_ptr.vmem [resolvable:$true] %s63
      %66 = dma.vmem_to_hbm [thread:$0]  %s64, 16, %s1, [#allocation4]
    $region13: #{tpu_custom_call.1} parent=1 // pred_fallthru
      _
    // Predicated region
    $region14: #{tpu_custom_call.1} parent=1 // pred_check
      _
    $region15: #{tpu_custom_call.1} parent=1 // pred_check_branch
      %68 = sbr.rel (0) target = $region17
    $region16: #{tpu_custom_call.1} parent=1 // pred_region
      %69 = dma.done [#allocation4], 16
    $region17: #{tpu_custom_call.1} parent=1 // pred_fallthru
      _
    %70 = vsyncpa [#allocation3], 1
    %71 = vsyncpa [#allocation4], 1

</llo_original>
